<compile_context>
chip_gen: v6e
topology: v6e:2x2x1
jax: 0.10.0
libtpu: 0.0.40
codegen_flags: <defaults>
</compile_context>

<pallas_src>
import math

import jax
import jax.numpy as jnp
from jax.experimental import pallas as pl
from jax.experimental.pallas import tpu as pltpu


def _scaler_kernel(x_ref, ab_ref, o_ref):
    # x_ref : (TR, Mf) tile of the (folded) row-major input
    # ab_ref: (2, Mf)  fused params: row 0 = 1/scale, row 1 = -mean/scale
    a = ab_ref[0:1, :]                          # (1, Mf) -> broadcast over rows
    b = ab_ref[1:2, :]                          # (1, Mf)
    x = x_ref[...].astype(jnp.float32)          # narrow I/O, f32 VPU math
    o_ref[...] = (x * a + b).astype(o_ref.dtype)   # one FMA / element, no divide


def log_mel_spectrogram_scaler(x, mean, scale, *,
                               tile_bytes=4 * 1024 * 1024,
                               target_grid_steps=4):
    """(x - mean) / scale with the feature (mel) axis last.

    x: (..., M); mean, scale: (M,).  Matches the PyTorch module's broadcast.
    """
    orig_shape = x.shape
    M = orig_shape[-1]
    xf = x.reshape(-1, M)                       # (rows, M), free contiguous reshape
    R = xf.shape[0]

    # Affine form precomputed once on tiny (M,) vectors:
    #   (x - mean) / scale == x * (1/scale) + (-mean/scale)
    a = 1.0 / scale.astype(jnp.float32)
    b = (-mean.astype(jnp.float32)) * a

    # Fold rows into lanes so the last dim is a multiple of 128 with NO padding
    # of the mel axis (e.g. M=80 -> g=8, last dim 640 = 5*128).
    g = 128 // math.gcd(M, 128)
    Rp = R
    if g > 1:
        rem = R % g
        if rem:
            # Rare fallback: pad (< g) trailing rows so the fold is exact.
            # Still far cheaper than lane-padding M (no inflated kernel traffic).
            Rp = R + (g - rem)
            xf = jnp.pad(xf, ((0, Rp - R), (0, 0)))
        xf = xf.reshape(Rp // g, g * M)         # free metadata reshape, lane-dense
        a = jnp.tile(a, g)
        b = jnp.tile(b, g)
    Rf, Mf = xf.shape
    ab = jnp.stack([a, b], axis=0)              # (2, Mf): single fused param DMA

    # Row tile: as large as the VMEM budget allows (2 buffers x (in+out) tiles
    # ~= 4 * tile_bytes stays well under the 32 MiB scoped limit on all gens),
    # but aim for >= target_grid_steps grid steps so megacore sharding (v7x)
    # and DMA/compute pipelining have work to overlap.
    itemsize = jnp.dtype(x.dtype).itemsize
    tr_budget = max(8, (tile_bytes // (Mf * itemsize)) // 8 * 8)
    tr_steps = max(8, (Rf // target_grid_steps) // 8 * 8)
    tr = min(tr_budget, tr_steps, Rf)
    if Rf <= 8:
        tr = Rf                                 # tiny input: single full-extent block
    grid = (pl.cdiv(Rf, tr),)

    out = pl.pallas_call(
        _scaler_kernel,
        out_shape=jax.ShapeDtypeStruct((Rf, Mf), x.dtype),
        grid_spec=pltpu.PrefetchScalarGridSpec(
            num_scalar_prefetch=0,
            grid=grid,
            in_specs=[
                pl.BlockSpec((tr, Mf), lambda r: (r, 0)),   # x row tile
                pl.BlockSpec((2, Mf), lambda r: (0, 0)),    # fused (1/scale, -mean/scale)
            ],
            out_specs=pl.BlockSpec((tr, Mf), lambda r: (r, 0)),
        ),
        compiler_params=pltpu.CompilerParams(
            dimension_semantics=("parallel",),
            vmem_limit_bytes=32 * 1024 * 1024,   # explicit: v5e default scope is 16 MiB
        ),
    )(xf, ab)

    out = out.reshape(Rp, M)
    if Rp != R:
        out = out[:R]
    return out.reshape(orig_shape)


if __name__ == "__main__":
    key = jax.random.PRNGKey(0)
    kx, km, kv, kx2, km2, kv2 = jax.random.split(key, 6)

    # Case 1: typical log-mel setup — n_mels=80 (not a multiple of 128) and a
    # frame count that is not a multiple of the fold factor g=8.  Exercises the
    # fold-rows-into-lanes path, the rare row-pad fallback, and a partial final
    # grid block.
    B, T, M = 2, 37, 80
    x = jax.random.normal(kx, (B, T, M), dtype=jnp.float32)
    mean = jax.random.normal(km, (M,), dtype=jnp.float32) * 0.5
    var = jax.random.uniform(kv, (M,), dtype=jnp.float32, minval=0.5, maxval=2.0)
    scale = jnp.sqrt(var)

    out = jax.block_until_ready(log_mel_spectrogram_scaler(x, mean, scale))
    ref = (x - mean[None, None, :]) / scale[None, None, :]
    assert out.shape == x.shape and out.dtype == x.dtype
    assert jnp.allclose(out, ref, atol=1e-5, rtol=1e-5)

    # Case 2: lane-aligned n_mels (no fold, g=1), multi-step grid.
    B2, T2, M2 = 2, 16, 128
    x2 = jax.random.normal(kx2, (B2, T2, M2), dtype=jnp.float32)
    mean2 = jax.random.normal(km2, (M2,), dtype=jnp.float32) * 0.5
    scale2 = jnp.sqrt(jax.random.uniform(kv2, (M2,), dtype=jnp.float32,
                                         minval=0.5, maxval=2.0))

    out2 = jax.block_until_ready(log_mel_spectrogram_scaler(x2, mean2, scale2))
    ref2 = (x2 - mean2[None, None, :]) / scale2[None, None, :]
    assert out2.shape == x2.shape and out2.dtype == x2.dtype
    assert jnp.allclose(out2, ref2, atol=1e-5, rtol=1e-5)

    print("KERNEL_OK")
</pallas_src>

<mosaic_0001>
module attributes {stable_mosaic.version = 11 : i64} {
  func.func @_scaler_kernel(%arg0: i32, %arg1: memref<8x640xf32, #tpu.memory_space<vmem>>, %arg2: memref<2x640xf32, #tpu.memory_space<vmem>>, %arg3: memref<8x640xf32, #tpu.memory_space<vmem>>) attributes {dimension_semantics = [#tpu.dimension_semantics<parallel>], iteration_bounds = array<i64: 2>, scalar_prefetch = 0 : i64, scratch_operands = 0 : i64, tpu.core_type = #tpu.core_type<tc>, window_params = [{transform_indices = @transform_0, window_bounds = array<i64: 8, 640>}, {pipeline_mode = #tpu.pipeline_mode<synchronous>, transform_indices = @transform_1, window_bounds = array<i64: 2, 640>}, {transform_indices = @transform_2, window_bounds = array<i64: 8, 640>}]} {
    %c0 = arith.constant 0 : index
    %c0_0 = arith.constant 0 : index
    %0 = vector.load %arg2[%c0, %c0_0] : memref<2x640xf32, #tpu.memory_space<vmem>>, vector<1x640xf32>
    %c1 = arith.constant 1 : index
    %c0_1 = arith.constant 0 : index
    %1 = vector.load %arg2[%c1, %c0_1] : memref<2x640xf32, #tpu.memory_space<vmem>>, vector<1x640xf32>
    %c0_2 = arith.constant 0 : index
    %c0_3 = arith.constant 0 : index
    %2 = vector.load %arg1[%c0_2, %c0_3] : memref<8x640xf32, #tpu.memory_space<vmem>>, vector<8x640xf32>
    %3 = vector.broadcast %0 : vector<1x640xf32> to vector<8x640xf32>
    %4 = arith.mulf %2, %3 : vector<8x640xf32>
    %5 = vector.broadcast %1 : vector<1x640xf32> to vector<8x640xf32>
    %6 = arith.addf %4, %5 : vector<8x640xf32>
    %c0_4 = arith.constant 0 : index
    %c0_5 = arith.constant 0 : index
    %7 = vector.load %arg3[%c0_4, %c0_5] : memref<8x640xf32, #tpu.memory_space<vmem>>, vector<8x640xf32>
    tpu.vector_store %arg3[%c0_4, %c0_5], %6 {strides = array<i32>} : memref<8x640xf32, #tpu.memory_space<vmem>>, vector<8x640xf32>,
    return
  }
  func.func @transform_0(%arg0: i32) -> (i32, i32) {
    %c0_i32 = arith.constant 0 : i32
    %c0_i32_0 = arith.constant 0 : i32
    return %arg0, %c0_i32 : i32, i32
  }
  func.func @transform_1(%arg0: i32) -> (i32, i32) {
    %c0_i32 = arith.constant 0 : i32
    %c0_i32_0 = arith.constant 0 : i32
    %c0_i32_1 = arith.constant 0 : i32
    return %c0_i32, %c0_i32_0 : i32, i32
  }
  func.func @transform_2(%arg0: i32) -> (i32, i32) {
    %c0_i32 = arith.constant 0 : i32
    %c0_i32_0 = arith.constant 0 : i32
    return %arg0, %c0_i32 : i32, i32
  }
}

</mosaic_0001>

<llo_original>
// kernel: tpu_custom_call.1
$region0: #{tpu_custom_call.1}
  #allocation0 [shape = 'u32[]', space=smem, size = 0x4, offset = 0x4, fixed_abs, tag = 'smem constant byte address 0x4 - core index']
  #allocation1 [shape = 'u32[144,128]{1,0:T(1,128)}', space=vmem, size = 0x12000, scoped, tag = 'internal scratch']
  %s0 = inlined_call_operand.hbm [shape: f32[10,640], index: 0, kind: input, shape index: {}]
  %s1 = inlined_call_operand.hbm [shape: f32[2,640], index: 1, kind: input, shape index: {}]
  %s2 = inlined_call_operand.hbm [shape: f32[10,640], index: 2, kind: output, shape index: {}]
  %s3 = sld [smem:[#allocation0]]
  $region49: #{tpu_custom_call.1} parent=0
    _
  %s5 = ssub.s32 1, %s3
  %s6 = scalar_select 0, %s5, %s3
  $region1: #{tpu_custom_call.1} parent=0
    #allocation2 [shape = 'u8[40960]{0}', space=vmem, size = 0xa000, scoped, tag = 'input window, operand 0']
    #allocation3 [shape = 's32[2]{0}', space=sflag, size = 0x8, scoped, tag = 'scoped memory for tpu_custom_call.1']
    #allocation4 [shape = 's32[2]{0}', space=sflag, size = 0x8, scoped, tag = 'scoped memory for tpu_custom_call.1']
    #allocation5 [shape = 'u8[5120]{0}', space=vmem, size = 0x1400, scoped, tag = 'input window, operand 1, single buffered']
    #allocation6 [shape = 's32[1]{0}', space=sflag, size = 0x4, scoped, tag = 'scoped memory for tpu_custom_call.1']
    #allocation7 [shape = 'u8[40960]{0}', space=vmem, size = 0xa000, scoped, tag = 'output window, operand 0']
    %7 = vsyncpa [#allocation3], 0
    %s8 = scalar_lea.sflag [#allocation3], 1
    %9 = vsyncpa %s8, 0
    %10 = vsyncpa [#allocation6], 0
    %11 = vsyncpa [#allocation4], 0
    %s12 = scalar_lea.sflag [#allocation4], 1
    %13 = vsyncpa %s12, 0
    loop: start=0, step=1, limit=4
    $region2: #{tpu_custom_call.1} parent=1 // loop_pre_header
      _
    $region3: #{tpu_custom_call.1} parent=1 // loop_header
      %s15 = sphi 0, %s19
      %p16 = scmp.ge.s32.totalorder %s15, 4
      %s25 = sphi 0, %s27
      %s28 = sphi 0, %s25
      %s29 = sphi 0, %s28
      %s45 = sphi 0, %s29
      %s49 = sphi 0, %s49
      %s51 = sphi 0, %s49
      %s52 = sphi 0, %s51
      %s66 = sphi 0, %s52
      %s72 = sphi 0, %s74
      %s75 = sphi 0, %s72
      %s76 = sphi 0, %s75
      %s92 = sphi 0, %s76
    $region4: #{tpu_custom_call.1} parent=1 // loop_header_branch
      %18 = sbr.rel (%p16) target = $region8
    $region5: #{tpu_custom_call.1} parent=1 // loop_body
      %s20 = ssub.s32 %s15, 1
      %s21 = ssub.s32 %s15, 2
      %s22 = sadd.s32 %s15, 1
      %s23 = ssub.s32 %s15, %s22
      %p24 = scmp.eq.s32.totalorder %s23, 0
      %s26 = sadd.s32 %s25, 1
      %s27 = scalar_select %p24, %s25, %s26
      %p30 = pneg %p24
      %p31 = scmp.eq.s32.totalorder %s15, 1
      %p32 = por %p30, %p31
      %p33 = scmp.ne.s32.totalorder %s25, %s28
      %p34 = scmp.eq.s32.totalorder %s15, 0
      %p35 = por %p33, %p34
      %p36 = scmp.ne.s32.totalorder %s25, %s28
      %p37 = scmp.eq.s32.totalorder %s20, 1
      %p38 = por %p36, %p37
      %p39 = scmp.ne.s32.totalorder %s28, %s29
      %p40 = scmp.eq.s32.totalorder %s20, 0
      %p41 = por %p39, %p40
      %p42 = scmp.ne.s32.totalorder %s28, %s29
      %p43 = scmp.eq.s32.totalorder %s21, 1
      %p44 = por %p42, %p43
      %p46 = scmp.ne.s32.totalorder %s29, %s45
      %p47 = scmp.eq.s32.totalorder %s21, 0
      %p48 = por %p46, %p47
      %s50 = sadd.s32 %s49, 1
      %p53 = scmp.eq.s32.totalorder %s15, 1
      %p54 = scmp.ne.s32.totalorder %s49, %s51
      %p55 = scmp.eq.s32.totalorder %s15, 0
      %p56 = por %p54, %p55
      %p57 = scmp.ne.s32.totalorder %s49, %s51
      %p58 = scmp.eq.s32.totalorder %s20, 1
      %p59 = por %p57, %p58
      %p60 = scmp.ne.s32.totalorder %s51, %s52
      %p61 = scmp.eq.s32.totalorder %s20, 0
      %p62 = por %p60, %p61
      %p63 = scmp.ne.s32.totalorder %s51, %s52
      %p64 = scmp.eq.s32.totalorder %s21, 1
      %p65 = por %p63, %p64
      %p67 = scmp.ne.s32.totalorder %s52, %s66
      %p68 = scmp.eq.s32.totalorder %s21, 0
      %p69 = por %p67, %p68
      %s70 = ssub.s32 %s15, %s22
      %p71 = scmp.eq.s32.totalorder %s70, 0
      %s73 = sadd.s32 %s72, 1
      %s74 = scalar_select %p71, %s72, %s73
      %p77 = pneg %p71
      %p78 = scmp.eq.s32.totalorder %s15, 1
      %p79 = por %p77, %p78
      %p80 = scmp.ne.s32.totalorder %s72, %s75
      %p81 = scmp.eq.s32.totalorder %s15, 0
      %p82 = por %p80, %p81
      %p83 = scmp.ne.s32.totalorder %s72, %s75
      %p84 = scmp.eq.s32.totalorder %s20, 1
      %p85 = por %p83, %p84
      %p86 = scmp.ne.s32.totalorder %s75, %s76
      %p87 = scmp.eq.s32.totalorder %s20, 0
      %p88 = por %p86, %p87
      %p89 = scmp.ne.s32.totalorder %s75, %s76
      %p90 = scmp.eq.s32.totalorder %s21, 1
      %p91 = por %p89, %p90
      %p93 = scmp.ne.s32.totalorder %s76, %s92
      %p94 = scmp.eq.s32.totalorder %s21, 0
      %p95 = por %p93, %p94
      %p96 = scmp.le.s32.totalorder 1, %s15
      %p97 = scmp.lt.s32.totalorder %s15, 3
      %p98 = pnand %p96, %p97
      %p99 = pneg %p98
      // Predicated region
      $region9: #{tpu_custom_call.1} parent=5 // pred_check
        _
      $region10: #{tpu_custom_call.1} parent=5 // pred_check_branch
        %101 = sbr.rel (%p98) target = $region12
      $region11: #{tpu_custom_call.1} parent=5 // pred_region
        %s102 = ssub.s32 %s15, 1
        // Predicated region
        $region13: #{tpu_custom_call.1} parent=11 // pred_check
          %p103 = pneg %p62
        $region14: #{tpu_custom_call.1} parent=11 // pred_check_branch
          %105 = sbr.rel (%p103) target = $region16
        $region15: #{tpu_custom_call.1} parent=11 // pred_region
          %s107 = ssub.s32 160, 160
          %108 = vsyncadd [#allocation6], %s107
          %s110 = sshll.u32 [#allocation5], 4
          %s111 = int_to_ptr.vmem [resolvable:$true] %s110
          %113 = dma.hbm_to_vmem [thread:$0]  %s1, 160, %s111, [#allocation6]
        $region16: #{tpu_custom_call.1} parent=11 // pred_fallthru
          _
      $region12: #{tpu_custom_call.1} parent=5 // pred_fallthru
        _
      %p114 = scmp.lt.s32.totalorder %s15, 2
      // Predicated region
      $region17: #{tpu_custom_call.1} parent=5 // pred_check
        %p115 = pneg %p114
      $region18: #{tpu_custom_call.1} parent=5 // pred_check_branch
        %117 = sbr.rel (%p115) target = $region20
      $region19: #{tpu_custom_call.1} parent=5 // pred_region
        // Predicated region
        $region21: #{tpu_custom_call.1} parent=19 // pred_check
          %p118 = pneg %p35
        $region22: #{tpu_custom_call.1} parent=19 // pred_check_branch
          %120 = sbr.rel (%p118) target = $region24
        $region23: #{tpu_custom_call.1} parent=19 // pred_region
          %s121 = sand.u32 %s25, 1
          %s122 = scalar_lea.sflag [#allocation3], %s121
          %s123 = sand.u32 %s25, 1
          %s124 = smul.addr %s123, 40
          %s125 = scalar_lea.vmem [#allocation2], %s124
          %s127 = ssub.s32 640, 640
          %128 = vsyncadd %s122, %s127
          %s129 = smul.addr %s15, 5
          %s130 = smul.addr %s129, 128
          %s131 = scalar_lea.hbm %s0, %s130
          %s133 = sshll.u32 %s125, 4
          %s134 = int_to_ptr.vmem [resolvable:$true] %s133
          %136 = dma.hbm_to_vmem [thread:$0]  %s131, 640, %s134, %s122
        $region24: #{tpu_custom_call.1} parent=19 // pred_fallthru
          _
      $region20: #{tpu_custom_call.1} parent=5 // pred_fallthru
        _
      %p137 = scmp.le.s32.totalorder 1, %s15
      %p138 = scmp.lt.s32.totalorder %s15, 3
      %p139 = pnand %p137, %p138
      %p140 = pneg %p139
      // Predicated region
      $region25: #{tpu_custom_call.1} parent=5 // pred_check
        _
      $region26: #{tpu_custom_call.1} parent=5 // pred_check_branch
        %142 = sbr.rel (%p139) target = $region28
      $region27: #{tpu_custom_call.1} parent=5 // pred_region
        %s143 = ssub.s32 %s15, 1
        %s144 = sand.u32 %s28, 1
        %s145 = scalar_lea.sflag [#allocation3], %s144
        %s146 = sand.u32 %s28, 1
        %s147 = smul.addr %s146, 40
        %s148 = scalar_lea.vmem [#allocation2], %s147
        // Predicated region
        $region29: #{tpu_custom_call.1} parent=27 // pred_check
          %p149 = pneg %p41
        $region30: #{tpu_custom_call.1} parent=27 // pred_check_branch
          %151 = sbr.rel (%p149) target = $region32
        $region31: #{tpu_custom_call.1} parent=27 // pred_region
          %152 = dma.done %s145, 640
        $region32: #{tpu_custom_call.1} parent=27 // pred_fallthru
          _
        // Predicated region
        $region33: #{tpu_custom_call.1} parent=27 // pred_check
          %p153 = pneg %p62
        $region34: #{tpu_custom_call.1} parent=27 // pred_check_branch
          %155 = sbr.rel (%p153) target = $region36
        $region35: #{tpu_custom_call.1} parent=27 // pred_region
          %156 = dma.done [#allocation6], 160
        $region36: #{tpu_custom_call.1} parent=27 // pred_fallthru
          _
        %s157 = sand.u32 %s28, 1
        %s158 = scalar_lea.sflag [#allocation3], %s157
        %s159 = sand.u32 %s28, 1
        %s160 = smul.addr %s159, 40
        %s161 = scalar_lea.vmem [#allocation2], %s160
        %p162 = pneg %p41
        %p163 = pneg %p38
        %p164 = pneg %p62
        %p165 = pneg %p59
        %p166 = pneg %p88
        %p167 = pneg %p85
        %s168 = sand.u32 %s75, 1
        %s169 = scalar_lea.sflag [#allocation4], %s168
        %s170 = sand.u32 %s75, 1
        %s171 = smul.addr %s170, 40
        %s172 = scalar_lea.vmem [#allocation7], %s171
        %v173 = vld [vmem:[#allocation5] ss:$2 sm:$0x1f]
        %s174 = scalar_lea.vmem [#allocation5], 1
        %v175 = vld [vmem:[%s174] ss:$2 sm:$0x1f]
        %v176 = vld [vmem:[%s148] sm:$0xff]
        %v177 = vld [vmem:[%s148 + $0x8] sm:$0xff]
        %v178 = vld [vmem:[%s148 + $0x10] sm:$0xff]
        %v179 = vld [vmem:[%s148 + $0x18] sm:$0xff]
        %v180 = vld [vmem:[%s148 + $0x20] sm:$0xff]
        %v182 = vlaneseq
        %v183 = vshrl.u32 %v182, 7
        %v184 = vsub.s32 0, %v183
        %v185 = vrot.slane %v173, %v184
        %v186 = vlaneseq
        %v187 = vshrl.u32 %v186, 7
        %v188 = vsub.s32 1, %v187
        %v189 = vrot.slane %v173, %v188
        %v190 = vlaneseq
        %v191 = vshrl.u32 %v190, 7
        %v192 = vsub.s32 2, %v191
        %v193 = vrot.slane %v173, %v192
        %v194 = vlaneseq
        %v195 = vshrl.u32 %v194, 7
        %v196 = vsub.s32 3, %v195
        %v197 = vrot.slane %v173, %v196
        %v198 = vlaneseq
        %v199 = vshrl.u32 %v198, 7
        %v200 = vsub.s32 4, %v199
        %v201 = vrot.slane %v173, %v200
        %v207 = vmul.f32 %v176, %v185
        %v208 = vmul.f32 %v177, %v189
        %v209 = vmul.f32 %v178, %v193
        %v210 = vmul.f32 %v179, %v197
        %v211 = vmul.f32 %v180, %v201
        %v213 = vlaneseq
        %v214 = vshrl.u32 %v213, 7
        %v215 = vsub.s32 0, %v214
        %v216 = vrot.slane %v175, %v215
        %v217 = vlaneseq
        %v218 = vshrl.u32 %v217, 7
        %v219 = vsub.s32 1, %v218
        %v220 = vrot.slane %v175, %v219
        %v221 = vlaneseq
        %v222 = vshrl.u32 %v221, 7
        %v223 = vsub.s32 2, %v222
        %v224 = vrot.slane %v175, %v223
        %v225 = vlaneseq
        %v226 = vshrl.u32 %v225, 7
        %v227 = vsub.s32 3, %v226
        %v228 = vrot.slane %v175, %v227
        %v229 = vlaneseq
        %v230 = vshrl.u32 %v229, 7
        %v231 = vsub.s32 4, %v230
        %v232 = vrot.slane %v175, %v231
        %v238 = vadd.f32 %v207, %v216
        %v239 = vadd.f32 %v208, %v220
        %v240 = vadd.f32 %v209, %v224
        %v241 = vadd.f32 %v210, %v228
        %v242 = vadd.f32 %v211, %v232
        %243 = vst [vmem:[%s172] sm:$0xff] %v238
        %244 = vst [vmem:[%s172 + $0x8] sm:$0xff] %v239
        %245 = vst [vmem:[%s172 + $0x10] sm:$0xff] %v240
        %246 = vst [vmem:[%s172 + $0x18] sm:$0xff] %v241
        %247 = vst [vmem:[%s172 + $0x20] sm:$0xff] %v242
        %s248 = sand.u32 %s75, 1
        %s249 = scalar_lea.sflag [#allocation4], %s248
        %s250 = sand.u32 %s75, 1
        %s251 = smul.addr %s250, 40
        %s252 = scalar_lea.vmem [#allocation7], %s251
        // Predicated region
        $region37: #{tpu_custom_call.1} parent=27 // pred_check
          %p253 = pneg %p85
        $region38: #{tpu_custom_call.1} parent=27 // pred_check_branch
          %255 = sbr.rel (%p253) target = $region40
        $region39: #{tpu_custom_call.1} parent=27 // pred_region
          %s257 = ssub.s32 640, 640
          %258 = vsyncadd %s249, %s257
          %s259 = smul.addr %s20, 5
          %s260 = smul.addr %s259, 128
          %s261 = scalar_lea.hbm %s2, %s260
          %s263 = sshll.u32 %s252, 4
          %s264 = int_to_ptr.vmem [resolvable:$true] %s263
          %266 = dma.vmem_to_hbm [thread:$0]  %s264, 640, %s261, %s249
        $region40: #{tpu_custom_call.1} parent=27 // pred_fallthru
          _
      $region28: #{tpu_custom_call.1} parent=5 // pred_fallthru
        _
      %p267 = scmp.le.s32.totalorder 2, %s15
      // Predicated region
      $region41: #{tpu_custom_call.1} parent=5 // pred_check
        %p268 = pneg %p267
      $region42: #{tpu_custom_call.1} parent=5 // pred_check_branch
        %270 = sbr.rel (%p268) target = $region44
      $region43: #{tpu_custom_call.1} parent=5 // pred_region
        %s271 = ssub.s32 %s15, 2
        // Predicated region
        $region45: #{tpu_custom_call.1} parent=43 // pred_check
          %p272 = pneg %p91
        $region46: #{tpu_custom_call.1} parent=43 // pred_check_branch
          %274 = sbr.rel (%p272) target = $region48
        $region47: #{tpu_custom_call.1} parent=43 // pred_region
          %s275 = sand.u32 %s76, 1
          %s276 = scalar_lea.sflag [#allocation4], %s275
          %s277 = sand.u32 %s76, 1
          %s278 = smul.addr %s277, 40
          %s279 = scalar_lea.vmem [#allocation7], %s278
          %280 = dma.done %s276, 640
        $region48: #{tpu_custom_call.1} parent=43 // pred_fallthru
          _
      $region44: #{tpu_custom_call.1} parent=5 // pred_fallthru
        _
    $region6: #{tpu_custom_call.1} parent=1 // loop_footer
      %s19 = sadd.s32 1, %s15
    $region7: #{tpu_custom_call.1} parent=1 // loop_footer_branch
      %14 = sbr.rel target = $region3
    $region8: #{tpu_custom_call.1} parent=1 // loop_exit
      _
    %281 = vsyncpa [#allocation3], 1
    %s282 = scalar_lea.sflag [#allocation3], 1
    %283 = vsyncpa %s282, 1
    %284 = vsyncpa [#allocation6], 1
    %285 = vsyncpa [#allocation4], 1
    %s286 = scalar_lea.sflag [#allocation4], 1
    %287 = vsyncpa %s286, 1

</llo_original>
